<compile_context>
chip_gen: v7x
topology: tpu7x:2x2x1
jax: 0.10.0
libtpu: 0.0.40
codegen_flags: <defaults>
</compile_context>

<pallas_src>
import functools

import jax
import jax.numpy as jnp
from jax import lax
from jax.experimental import pallas as pl
from jax.experimental.pallas import tpu as pltpu


def _round_up(x, m):
    return (x + m - 1) // m * m


def _vmem_cap_bytes():
    # Per-generation VMEM capacity (v5e/v6e: 128 MiB, v7x: 64 MiB).
    try:
        return int(pltpu.get_tpu_info().vmem_capacity_bytes)
    except Exception:  # pragma: no cover - conservative fallback
        return 64 * 1024 * 1024


def _vmem_limit(working_set_bytes):
    # 2x headroom for double-buffered blocks, clamped to ~7/8 of physical VMEM
    # so compiler-internal scratch / output buffers still fit (56 MiB on v7x,
    # 112 MiB on v5e/v6e).
    cap = _vmem_cap_bytes()
    return int(min(max(4 * 1024 * 1024, 2 * working_set_bytes), cap * 7 // 8))


# --------------------------------------------------------------------------
# Kernel 1: fused per-node projections
#   [p ; s] = nf @ [Wm_node ; Wa_self] + [b_msg ; b_apply]   (one 2*dpad matmul)
# --------------------------------------------------------------------------
def node_proj_kernel(nf_ref, w_ps_ref, b_ps_ref, p_ref, s_ref, *, dpad):
    f32 = jnp.float32
    ps = jnp.dot(nf_ref[...], w_ps_ref[...], preferred_element_type=f32) + b_ps_ref[...]
    p_ref[...] = ps[:, :dpad]          # message half  (lane-aligned slice)
    s_ref[...] = ps[:, dpad:]          # apply-self half


# --------------------------------------------------------------------------
# Kernel 2 (fused message + scatter-mean + apply):
#   grid = (node tiles, edge tiles); edge axis clamped to the per-node-tile
#   window [lo, hi] of dst-sorted edge tiles; accumulator in VMEM scratch.
# --------------------------------------------------------------------------
def fused_msg_agg_apply_kernel(src_sm, lo_sm, hi_sm, cnt_sm,          # SMEM
                               dst_ref, ef_ref, p_ref, invdeg_ref, s_ref,
                               wm_edge_ref, wa_neigh_ref,
                               out_ref,
                               acc_ref, msg_ref, *, tn, te):
    f32 = jnp.float32
    i = pl.program_id(0)
    e = pl.program_id(1)

    @pl.when(e == 0)
    def _():
        acc_ref[...] = jnp.zeros_like(acc_ref)

    lo = lo_sm[i]
    hi = hi_sm[i]
    # Only edge tiles inside this node tile's sorted window carry its dsts.
    active = (cnt_sm[i] > 0) & (e >= lo) & (e <= hi)

    @pl.when(active)
    def _():
        # Inside the window the clamped index maps load edge tile `e`.
        ebase = e * te

        # Per-edge messages for this tile: msg = ef @ Wm_edge + p[src].
        msg_ref[...] = jnp.dot(ef_ref[...], wm_edge_ref[...],
                               preferred_element_type=f32)

        def gather_row(j, carry):
            sidx = src_sm[ebase + j]                         # scalar from SMEM
            # In-place add of the projected source row (padded edges gather
            # row 0 of p: meaningless but harmless — dst=-1 never matches).
            msg_ref[pl.ds(j, 1), :] += p_ref[pl.ds(sidx, 1), :]
            return carry

        lax.fori_loop(0, te, gather_row, 0, unroll=8)

        # Scatter-add into this node tile via a (TE, TN) destination one-hot.
        node_ids = i * tn + lax.broadcasted_iota(jnp.int32, (te, tn), 1)
        oh = (dst_ref[...] == node_ids).astype(f32)           # [TE, TN]
        acc_ref[...] += lax.dot_general(oh, msg_ref[...],
                                        (((0,), (0,)), ((), ())),
                                        preferred_element_type=f32)

    @pl.when(e == pl.num_programs(1) - 1)
    def _():
        h_neigh = acc_ref[...] * invdeg_ref[...]              # mean (0 if deg==0)
        out = s_ref[...] + jnp.dot(h_neigh, wa_neigh_ref[...],
                                   preferred_element_type=f32)
        out_ref[...] = jnp.maximum(out, 0.0)


# --------------------------------------------------------------------------
# Wrapper
# --------------------------------------------------------------------------
def sage_layer(src, dst, nfeats, efeats, w_msg, b_msg, w_apply, b_apply,
               *, tile_n=256, tile_e=256):
    """nfeats: [N, 1, Din], efeats: [E, 1, De]; returns [N, 1, Dout]."""
    f32 = jnp.float32
    N, _, din = nfeats.shape
    E, _, de = efeats.shape
    dout = w_msg.shape[0]

    dpad = _round_up(dout, 128)               # lane-dense message/output width
    tile_n = min(tile_n, _round_up(N, 8))     # avoid huge padding on tiny graphs
    tile_e = min(tile_e, _round_up(E, 8))
    assert tile_n % 8 == 0 and tile_e % 8 == 0
    n_pad = _round_up(N, tile_n)
    e_pad = _round_up(E, tile_e)
    nt, et = n_pad // tile_n, e_pad // tile_e

    # ---- structure-only preprocessing (glue, no feature math) ----
    src_i = src.astype(jnp.int32)
    dst_i = dst.astype(jnp.int32)
    order = jnp.argsort(dst_i)                # sort edges by destination
    src_s = src_i[order]
    dst_s = dst_i[order]
    ef_s = efeats.reshape(E, de).astype(f32)[order]

    # Per-node-tile contiguous sorted-edge ranges -> edge-tile [lo, hi] windows.
    tile_of_edge = dst_s // tile_n
    cnt = jnp.zeros((nt,), jnp.int32).at[tile_of_edge].add(1)
    ends = jnp.cumsum(cnt)
    starts = ends - cnt
    lo = jnp.where(cnt > 0, starts // tile_e, 0).astype(jnp.int32)
    hi = jnp.where(cnt > 0, (ends - 1) // tile_e, 0).astype(jnp.int32)

    # TODO(synk): mask ragged last tiles in-kernel instead of these pad-copies.
    nf = jnp.zeros((n_pad, din), f32).at[:N].set(nfeats.reshape(N, din).astype(f32))
    ef = jnp.zeros((e_pad, de), f32).at[:E].set(ef_s)
    src_pad = jnp.zeros((e_pad,), jnp.int32).at[:E].set(src_s)
    # padded edges get dst = -1 so they match no node in the scatter one-hot
    dst_pad = jnp.full((e_pad, 1), -1, jnp.int32).at[:E, 0].set(dst_s)

    # Split the concatenated Linear weights, transpose to x@W layout, pad lanes.
    # Kernel 1 RHS fuses Wm_node || Wa_self into one (din, 2*dpad) matrix.
    w_ps = jnp.zeros((din, 2 * dpad), f32)
    w_ps = w_ps.at[:, :dout].set(w_msg[:, :din].T.astype(f32))
    w_ps = w_ps.at[:, dpad:dpad + dout].set(w_apply[:, :din].T.astype(f32))
    b_ps = jnp.zeros((1, 2 * dpad), f32)
    b_ps = b_ps.at[0, :dout].set(b_msg.astype(f32))
    b_ps = b_ps.at[0, dpad:dpad + dout].set(b_apply.astype(f32))
    wm_edge = jnp.zeros((de, dpad), f32).at[:, :dout].set(w_msg[:, din:].T.astype(f32))
    wa_neigh = jnp.zeros((dpad, dpad), f32).at[:dout, :dout].set(
        w_apply[:, din:].T.astype(f32))

    # In-degrees depend only on graph structure -> precompute inverse once.
    deg = jnp.zeros((n_pad,), f32).at[dst_i].add(1.0)
    inv_deg = (1.0 / jnp.maximum(deg, 1.0)).reshape(n_pad, 1)

    # ---------------- Kernel 1: fused node projections ----------------
    k1_bytes = (tile_n * din + din * 2 * dpad + 2 * dpad + 2 * tile_n * dpad) * 4
    p_nodes, s_self = pl.pallas_call(
        functools.partial(node_proj_kernel, dpad=dpad),
        out_shape=(jax.ShapeDtypeStruct((n_pad, dpad), f32),
                   jax.ShapeDtypeStruct((n_pad, dpad), f32)),
        grid=(nt,),
        in_specs=[pl.BlockSpec((tile_n, din), lambda i: (i, 0)),
                  pl.BlockSpec((din, 2 * dpad), lambda i: (0, 0)),
                  pl.BlockSpec((1, 2 * dpad), lambda i: (0, 0))],
        out_specs=(pl.BlockSpec((tile_n, dpad), lambda i: (i, 0)),
                   pl.BlockSpec((tile_n, dpad), lambda i: (i, 0))),
        compiler_params=pltpu.CompilerParams(
            dimension_semantics=("parallel",),
            vmem_limit_bytes=_vmem_limit(k1_bytes)),
        cost_estimate=pl.CostEstimate(
            flops=4 * n_pad * din * dpad, transcendentals=0,
            bytes_accessed=(n_pad * din + 2 * din * dpad + 2 * n_pad * dpad) * 4),
    )(nf, w_ps, b_ps)

    # -------- Kernel 2: fused messages + scatter-mean + apply + relu --------
    def _edge_window(i, e, src, lo_r, hi_r, cnt_r):
        # Clamp the edge-tile index into this node tile's sorted window; the
        # block index is constant outside it, so those tiles are never re-DMA'd.
        return (jnp.minimum(jnp.maximum(e, lo_r[i]), hi_r[i]), 0)

    k2_bytes = (e_pad + 3 * nt                                     # SMEM scalars
                + 2 * n_pad * dpad                                 # p (resident)
                + 2 * (tile_e + tile_e * de)                       # dst + ef
                + tile_n * (1 + 2 * dpad)                          # invdeg, s, out
                + de * dpad + dpad * dpad                          # weights
                + tile_n * dpad + tile_e * dpad) * 4               # acc + msg
    out_pad = pl.pallas_call(
        functools.partial(fused_msg_agg_apply_kernel, tn=tile_n, te=tile_e),
        out_shape=jax.ShapeDtypeStruct((n_pad, dpad), f32),
        grid_spec=pltpu.PrefetchScalarGridSpec(
            num_scalar_prefetch=4,
            grid=(nt, et),
            in_specs=[
                pl.BlockSpec((tile_e, 1), _edge_window),                     # dst
                pl.BlockSpec((tile_e, de), _edge_window),                    # ef
                pl.BlockSpec((n_pad, dpad), lambda i, e, s, l, h, c: (0, 0)),   # p
                pl.BlockSpec((tile_n, 1), lambda i, e, s, l, h, c: (i, 0)),  # 1/deg
                pl.BlockSpec((tile_n, dpad), lambda i, e, s, l, h, c: (i, 0)),  # s
                pl.BlockSpec((de, dpad), lambda i, e, s, l, h, c: (0, 0)),   # Wm_e
                pl.BlockSpec((dpad, dpad), lambda i, e, s, l, h, c: (0, 0)), # Wa_n
            ],
            out_specs=pl.BlockSpec((tile_n, dpad), lambda i, e, s, l, h, c: (i, 0)),
            scratch_shapes=[pltpu.VMEM((tile_n, dpad), f32),   # accumulator
                            pltpu.VMEM((tile_e, dpad), f32)]), # per-tile messages
        compiler_params=pltpu.CompilerParams(
            dimension_semantics=("parallel", "arbitrary"),
            vmem_limit_bytes=_vmem_limit(k2_bytes)),
        cost_estimate=pl.CostEstimate(
            flops=(2 * e_pad * de * dpad + 2 * e_pad * tile_n * dpad
                   + 2 * n_pad * dpad * dpad),
            transcendentals=0,
            bytes_accessed=(n_pad * dpad + e_pad * (1 + de)
                            + n_pad * (1 + 2 * dpad)
                            + de * dpad + dpad * dpad) * 4),
    )(src_pad, lo, hi, cnt, dst_pad, ef, p_nodes, inv_deg, s_self,
      wm_edge, wa_neigh)

    return out_pad[:N, :dout].reshape(N, 1, dout)


# --------------------------------------------------------------------------
# Pure-JAX reference (mirrors the PyTorch/DGL forward)
# --------------------------------------------------------------------------
def _reference(src, dst, nfeats, efeats, w_msg, b_msg, w_apply, b_apply):
    N, _, din = nfeats.shape
    E = efeats.shape[0]
    dout = w_msg.shape[0]
    nf = nfeats.reshape(N, din)
    efm = efeats.reshape(E, -1)
    h_src = nf[src]
    msg = jnp.concatenate([h_src, efm], axis=-1) @ w_msg.T + b_msg
    sums = jnp.zeros((N, dout), jnp.float32).at[dst].add(msg)
    cnts = jnp.zeros((N,), jnp.float32).at[dst].add(1.0)
    h_neigh = sums / jnp.maximum(cnts, 1.0)[:, None]
    out = jnp.concatenate([nf, h_neigh], axis=-1) @ w_apply.T + b_apply
    return jnp.maximum(out, 0.0).reshape(N, 1, dout)


if __name__ == "__main__":
    key = jax.random.PRNGKey(0)
    N, E = 64, 256                     # nodes, edges
    ndim_in, edims, ndim_out = 32, 16, 32

    k = jax.random.split(key, 8)
    nfeats = jax.random.normal(k[0], (N, 1, ndim_in), jnp.float32)
    efeats = jax.random.normal(k[1], (E, 1, edims), jnp.float32)
    src = jax.random.randint(k[2], (E,), 0, N, jnp.int32)
    dst = jax.random.randint(k[3], (E,), 0, N, jnp.int32)

    b1 = 1.0 / jnp.sqrt(ndim_in + edims)
    b2 = 1.0 / jnp.sqrt(ndim_in + ndim_out)
    w_msg = jax.random.uniform(k[4], (ndim_out, ndim_in + edims), jnp.float32, -b1, b1)
    b_msg = jax.random.uniform(k[5], (ndim_out,), jnp.float32, -b1, b1)
    w_apply = jax.random.uniform(k[6], (ndim_out, ndim_in + ndim_out), jnp.float32, -b2, b2)
    b_apply = jax.random.uniform(k[7], (ndim_out,), jnp.float32, -b2, b2)

    ref = _reference(src, dst, nfeats, efeats, w_msg, b_msg, w_apply, b_apply)

    # Default (large) tiles: single tile per axis at this size.
    out = sage_layer(src, dst, nfeats, efeats, w_msg, b_msg, w_apply, b_apply)
    out = jax.block_until_ready(out)
    assert out.shape == (N, 1, ndim_out)
    assert jnp.allclose(out, ref, rtol=1e-4, atol=1e-4), "mismatch vs reference"

    # Small tiles: exercises the multi-tile, data-dependent edge-window path
    # (several node tiles x several edge tiles, with pl.when-skipped steps).
    out2 = sage_layer(src, dst, nfeats, efeats, w_msg, b_msg, w_apply, b_apply,
                      tile_n=16, tile_e=32)
    out2 = jax.block_until_ready(out2)
    assert jnp.allclose(out2, ref, rtol=1e-4, atol=1e-4), "tiled mismatch vs reference"

    print("KERNEL_OK")
</pallas_src>

<mosaic_0001>
module attributes {stable_mosaic.version = 11 : i64} {
  func.func @node_proj_kernel(%arg0: i32, %arg1: memref<64x32xf32, #tpu.memory_space<vmem>>, %arg2: memref<32x256xf32, #tpu.memory_space<vmem>>, %arg3: memref<1x256xf32, #tpu.memory_space<vmem>>, %arg4: memref<64x128xf32, #tpu.memory_space<vmem>>, %arg5: memref<64x128xf32, #tpu.memory_space<vmem>>) attributes {dimension_semantics = [#tpu.dimension_semantics<parallel>], iteration_bounds = array<i64: 1>, scalar_prefetch = 0 : i64, scratch_operands = 0 : i64, tpu.core_type = #tpu.core_type<tc>, window_params = [{transform_indices = @transform_0, window_bounds = array<i64: 64, 32>}, {pipeline_mode = #tpu.pipeline_mode<synchronous>, transform_indices = @transform_1, window_bounds = array<i64: 32, 256>}, {pipeline_mode = #tpu.pipeline_mode<synchronous>, transform_indices = @transform_2, window_bounds = array<i64: 1, 256>}, {transform_indices = @transform_3, window_bounds = array<i64: 64, 128>}, {transform_indices = @transform_4, window_bounds = array<i64: 64, 128>}]} {
    %c0 = arith.constant 0 : index
    %c0_0 = arith.constant 0 : index
    %0 = vector.load %arg1[%c0, %c0_0] : memref<64x32xf32, #tpu.memory_space<vmem>>, vector<64x32xf32>
    %c0_1 = arith.constant 0 : index
    %c0_2 = arith.constant 0 : index
    %1 = vector.load %arg2[%c0_1, %c0_2] : memref<32x256xf32, #tpu.memory_space<vmem>>, vector<32x256xf32>
    %cst = arith.constant dense<0.000000e+00> : vector<64x256xf32>
    %2 = tpu.matmul %0, %1, %cst {dimension_numbers = #tpu.dot_dimension_numbers<[1], [0], [0], [1], [0, 0, 1, 1], [], []>} : vector<64x32xf32>, vector<32x256xf32>, vector<64x256xf32> -> vector<64x256xf32>
    %c0_3 = arith.constant 0 : index
    %c0_4 = arith.constant 0 : index
    %3 = vector.load %arg3[%c0_3, %c0_4] : memref<1x256xf32, #tpu.memory_space<vmem>>, vector<1x256xf32>
    %4 = vector.broadcast %3 : vector<1x256xf32> to vector<64x256xf32>
    %5 = arith.addf %2, %4 : vector<64x256xf32>
    %6 = vector.extract_strided_slice %5 {offsets = [0, 0], sizes = [64, 128], strides = [1, 1]} : vector<64x256xf32> to vector<64x128xf32>
    %c0_5 = arith.constant 0 : index
    %c0_6 = arith.constant 0 : index
    %7 = vector.load %arg4[%c0_5, %c0_6] : memref<64x128xf32, #tpu.memory_space<vmem>>, vector<64x128xf32>
    tpu.vector_store %arg4[%c0_5, %c0_6], %6 {strides = array<i32>} : memref<64x128xf32, #tpu.memory_space<vmem>>, vector<64x128xf32>,
    %8 = vector.extract_strided_slice %5 {offsets = [0, 128], sizes = [64, 128], strides = [1, 1]} : vector<64x256xf32> to vector<64x128xf32>
    %c0_7 = arith.constant 0 : index
    %c0_8 = arith.constant 0 : index
    %9 = vector.load %arg5[%c0_7, %c0_8] : memref<64x128xf32, #tpu.memory_space<vmem>>, vector<64x128xf32>
    tpu.vector_store %arg5[%c0_7, %c0_8], %8 {strides = array<i32>} : memref<64x128xf32, #tpu.memory_space<vmem>>, vector<64x128xf32>,
    return
  }
  func.func @transform_0(%arg0: i32) -> (i32, i32) {
    %c0_i32 = arith.constant 0 : i32
    %c0_i32_0 = arith.constant 0 : i32
    return %arg0, %c0_i32 : i32, i32
  }
  func.func @transform_1(%arg0: i32) -> (i32, i32) {
    %c0_i32 = arith.constant 0 : i32
    %c0_i32_0 = arith.constant 0 : i32
    %c0_i32_1 = arith.constant 0 : i32
    return %c0_i32, %c0_i32_0 : i32, i32
  }
  func.func @transform_2(%arg0: i32) -> (i32, i32) {
    %c0_i32 = arith.constant 0 : i32
    %c0_i32_0 = arith.constant 0 : i32
    %c0_i32_1 = arith.constant 0 : i32
    return %c0_i32, %c0_i32_0 : i32, i32
  }
  func.func @transform_3(%arg0: i32) -> (i32, i32) {
    %c0_i32 = arith.constant 0 : i32
    %c0_i32_0 = arith.constant 0 : i32
    return %arg0, %c0_i32 : i32, i32
  }
  func.func @transform_4(%arg0: i32) -> (i32, i32) {
    %c0_i32 = arith.constant 0 : i32
    %c0_i32_0 = arith.constant 0 : i32
    return %arg0, %c0_i32 : i32, i32
  }
}

</mosaic_0001>

<llo_original>
// kernel: tpu_custom_call.1
$region0: #{tpu_custom_call.1}
  #allocation0 [shape = 'u32[]', space=smem, size = 0x4, offset = 0x4, fixed_abs, tag = 'smem constant byte address 0x4 - core index']
  #allocation1 [shape = 'u32[144,128]{1,0:T(1,128)}', space=vmem, size = 0x12000, scoped, tag = 'internal scratch']
  %s0 = inlined_call_operand.vmem [shape: f32[64,32], index: 0, kind: input, shape index: {}]
  %s1 = inlined_call_operand.vmem [shape: f32[32,256], index: 1, kind: input, shape index: {}]
  %s2 = inlined_call_operand.vmem [shape: f32[1,256], index: 2, kind: input, shape index: {}]
  %s3 = inlined_call_operand.hbm [shape: f32[64,128], index: 3, kind: output, shape index: {0}]
  %s4 = inlined_call_operand.hbm [shape: f32[64,128], index: 4, kind: output, shape index: {1}]
  %5 = xla_tuple %s3, %s4
  %s6 = sld [smem:[#allocation0]]
  $region30: #{tpu_custom_call.1} parent=0
    _
  %s8 = ssub.s32 1, %s6
  %s9 = scalar_select 0, %s8, %s6
  $region1: #{tpu_custom_call.1} parent=0
    #allocation2 [shape = 'u8[32768]{0}', space=vmem, size = 0x8000, scoped, tag = 'output window, operand 0, single buffered']
    #allocation3 [shape = 's32[1]{0}', space=sflag, size = 0x4, scoped, tag = 'scoped memory for tpu_custom_call.1']
    #allocation4 [shape = 'u8[32768]{0}', space=vmem, size = 0x8000, scoped, tag = 'output window, operand 1, single buffered']
    #allocation5 [shape = 's32[1]{0}', space=sflag, size = 0x4, scoped, tag = 'scoped memory for tpu_custom_call.1']
    %10 = vsyncpa [#allocation3], 0
    %11 = vsyncpa [#allocation5], 0
    // Predicated region
    $region2: #{tpu_custom_call.1} parent=1 // pred_check
      _
    $region3: #{tpu_custom_call.1} parent=1 // pred_check_branch
      %13 = sbr.rel (0) target = $region5
    $region4: #{tpu_custom_call.1} parent=1 // pred_region
      _
    $region5: #{tpu_custom_call.1} parent=1 // pred_fallthru
      _
    // Predicated region
    $region6: #{tpu_custom_call.1} parent=1 // pred_check
      _
    $region7: #{tpu_custom_call.1} parent=1 // pred_check_branch
      %15 = sbr.rel (0) target = $region9
    $region8: #{tpu_custom_call.1} parent=1 // pred_region
      _
    $region9: #{tpu_custom_call.1} parent=1 // pred_fallthru
      _
    // Predicated region
    $region10: #{tpu_custom_call.1} parent=1 // pred_check
      _
    $region11: #{tpu_custom_call.1} parent=1 // pred_check_branch
      %17 = sbr.rel (0) target = $region13
    $region12: #{tpu_custom_call.1} parent=1 // pred_region
      _
    $region13: #{tpu_custom_call.1} parent=1 // pred_fallthru
      _
    %v18 = vld [vmem:[%s0] sm:$0xff]
    %v19 = vld [vmem:[%s0 + $0x8] sm:$0xff]
    %v20 = vld [vmem:[%s0 + $0x10] sm:$0xff]
    %v21 = vld [vmem:[%s0 + $0x18] sm:$0xff]
    %v22 = vld [vmem:[%s0 + $0x20] sm:$0xff]
    %v23 = vld [vmem:[%s0 + $0x28] sm:$0xff]
    %v24 = vld [vmem:[%s0 + $0x30] sm:$0xff]
    %v25 = vld [vmem:[%s0 + $0x38] sm:$0xff]
    %v26 = vld [vmem:[%s1] sm:$0xff]
    %v27 = vld [vmem:[%s1 + $0x8] sm:$0xff]
    %v28 = vld [vmem:[%s1 + $0x10] sm:$0xff]
    %v29 = vld [vmem:[%s1 + $0x18] sm:$0xff]
    %v30 = vld [vmem:[%s1 + $0x20] sm:$0xff]
    %v31 = vld [vmem:[%s1 + $0x28] sm:$0xff]
    %v32 = vld [vmem:[%s1 + $0x30] sm:$0xff]
    %v33 = vld [vmem:[%s1 + $0x38] sm:$0xff]
    %v34 = vld [vmem:[%s2] sm:$0x3]
    %v36 = vlaneseq
    %v37 = vshrl.u32 %v36, 7
    %v38 = vsub.s32 0, %v37
    %v39 = vrot.slane %v34, %v38
    %v40 = vlaneseq
    %v41 = vshrl.u32 %v40, 7
    %v42 = vsub.s32 1, %v41
    %v43 = vrot.slane %v34, %v42
    %vm46 = vcmask 261120
    %v48 = vsel %vm46, %v18, 0
    %v51 = vsel %vm46, %v19, 0
    %v54 = vsel %vm46, %v20, 0
    %v57 = vsel %vm46, %v21, 0
    %v60 = vsel %vm46, %v22, 0
    %v63 = vsel %vm46, %v23, 0
    %v66 = vsel %vm46, %v24, 0
    %v69 = vsel %vm46, %v25, 0
    %71 = vmatprep.subr.mxu0 %v27
    %72 = vmatpush1.msra.mxu0 %v26
    %73 = vmatprep.subr.mxu0 %v29
    %74 = vmatpush1.msra.mxu0 %v28
    %75 = vmatprep.subr.mxu0 %v31
    %76 = vmatpush1.msra.mxu0 %v30
    %77 = vmatprep.subr.mxu0 %v33
    %78 = vmatpush1.msra.mxu0 %v32
    %79 = vmatprep.subr.mxu0 0.0
    %80 = vmatpush1.msra.mxu0 0.0
    %81 = vmatprep.subr.mxu0 0.0
    %82 = vmatpush1.msra.mxu0 0.0
    %83 = vmatprep.subr.mxu0 0.0
    %84 = vmatpush1.msra.mxu0 0.0
    %85 = vmatprep.subr.mxu0 0.0
    %86 = vmatpush1.msra.mxu0 0.0
    %87 = vmatprep.subr.mxu0 0.0
    %88 = vmatpush1.msra.mxu0 0.0
    %89 = vmatprep.subr.mxu0 0.0
    %90 = vmatpush1.msra.mxu0 0.0
    %91 = vmatprep.subr.mxu0 0.0
    %92 = vmatpush1.msra.mxu0 0.0
    %93 = vmatprep.subr.mxu0 0.0
    %94 = vmatpush1.msra.mxu0 0.0
    %95 = vmatprep.subr.mxu0 0.0
    %96 = vmatpush1.msra.mxu0 0.0
    %97 = vmatprep.subr.mxu0 0.0
    %98 = vmatpush1.msra.mxu0 0.0
    %99 = vmatprep.subr.mxu0 0.0
    %100 = vmatpush1.msra.mxu0 0.0
    %101 = vmatprep.subr.mxu0 0.0
    %102 = vmatpush1.msra.mxu0 0.0
    %103 = vmatprep.subr.mxu0 0.0
    %104 = vmatpush1.msra.mxu0 0.0
    %105 = vmatprep.subr.mxu0 0.0
    %106 = vmatpush1.msra.mxu0 0.0
    %107 = vmatprep.subr.mxu0 0.0
    %108 = vmatpush1.msra.mxu0 0.0
    %109 = vmatprep.subr.mxu0 0.0
    %110 = vmatpush1.msra.mxu0 0.0
    %111 = vmatprep.subr.mxu0 0.0
    %112 = vmatpush1.msra.mxu0 0.0
    %113 = vmatprep.subr.mxu0 0.0
    %114 = vmatpush1.msra.mxu0 0.0
    %115 = vmatprep.subr.mxu0 0.0
    %116 = vmatpush1.msra.mxu0 0.0
    %117 = vmatprep.subr.mxu0 0.0
    %118 = vmatpush1.msra.mxu0 0.0
    %119 = vmatprep.subr.mxu0 0.0
    %120 = vmatpush1.msra.mxu0 0.0
    %121 = vmatprep.subr.mxu0 0.0
    %122 = vmatpush1.msra.mxu0 0.0
    %123 = vmatprep.subr.mxu0 0.0
    %124 = vmatpush1.msra.mxu0 0.0
    %125 = vmatprep.subr.mxu0 0.0
    %126 = vmatpush1.msra.mxu0 0.0
    %127 = vmatprep.subr.mxu0 0.0
    %128 = vmatpush1.msra.mxu0 0.0
    %129 = vmatprep.subr.mxu0 0.0
    %130 = vmatpush1.msra.mxu0 0.0
    %131 = vmatprep.subr.mxu0 0.0
    %132 = vmatpush1.msra.mxu0 0.0
    %133 = vmatprep.subr.mxu0 0.0
    %134 = vmatpush1.msra.mxu0 0.0
    %135 = vmatprep.mubr.f32.mxu0 0.0
    %136 = vmatmul.mubr.f32.gmra.mrb[0].mxu0 %v48
    %v137 = vpop.f32.mrb[0].mxu0
    %v138 = vadd.f32 %v39, %v137
    %v139 = vpop.f32.mrb[0].mxu0
    %v140 = vadd.f32 %v43, %v139
    %141 = vmatprep.mubr.f32.mxu0 0.0
    %142 = vmatmul.mubr.f32.gmra.mrb[0].mxu0 %v51
    %v143 = vpop.f32.mrb[0].mxu0
    %v144 = vadd.f32 %v39, %v143
    %v145 = vpop.f32.mrb[0].mxu0
    %v146 = vadd.f32 %v43, %v145
    %147 = vmatprep.mubr.f32.mxu0 0.0
    %148 = vmatmul.mubr.f32.gmra.mrb[0].mxu0 %v54
    %v149 = vpop.f32.mrb[0].mxu0
    %v150 = vadd.f32 %v39, %v149
    %v151 = vpop.f32.mrb[0].mxu0
    %v152 = vadd.f32 %v43, %v151
    %153 = vmatprep.mubr.f32.mxu0 0.0
    %154 = vmatmul.mubr.f32.gmra.mrb[0].mxu0 %v57
    %v155 = vpop.f32.mrb[0].mxu0
    %v156 = vadd.f32 %v39, %v155
    %v157 = vpop.f32.mrb[0].mxu0
    %v158 = vadd.f32 %v43, %v157
    %159 = vmatprep.mubr.f32.mxu0 0.0
    %160 = vmatmul.mubr.f32.gmra.mrb[0].mxu0 %v60
    %v161 = vpop.f32.mrb[0].mxu0
    %v162 = vadd.f32 %v39, %v161
    %v163 = vpop.f32.mrb[0].mxu0
    %v164 = vadd.f32 %v43, %v163
    %165 = vmatprep.mubr.f32.mxu0 0.0
    %166 = vmatmul.mubr.f32.gmra.mrb[0].mxu0 %v63
    %v167 = vpop.f32.mrb[0].mxu0
    %v168 = vadd.f32 %v39, %v167
    %v169 = vpop.f32.mrb[0].mxu0
    %v170 = vadd.f32 %v43, %v169
    %171 = vmatprep.mubr.f32.mxu0 0.0
    %172 = vmatmul.mubr.f32.gmra.mrb[0].mxu0 %v66
    %v173 = vpop.f32.mrb[0].mxu0
    %v174 = vadd.f32 %v39, %v173
    %v175 = vpop.f32.mrb[0].mxu0
    %v176 = vadd.f32 %v43, %v175
    %177 = vmatprep.mubr.f32.mxu0 0.0
    %178 = vmatmul.mubr.f32.gmra.mrb[0].mxu0 %v69
    %v179 = vpop.f32.mrb[0].mxu0
    %v180 = vadd.f32 %v39, %v179
    %v181 = vpop.f32.mrb[0].mxu0
    %v182 = vadd.f32 %v43, %v181
    %183 = vdwg.mxu0
    %184 = vst [vmem:[#allocation2] sm:$0xff] %v138
    %185 = vst [vmem:[#allocation2 + $0x8] sm:$0xff] %v144
    %186 = vst [vmem:[#allocation2 + $0x10] sm:$0xff] %v150
    %187 = vst [vmem:[#allocation2 + $0x18] sm:$0xff] %v156
    %188 = vst [vmem:[#allocation2 + $0x20] sm:$0xff] %v162
    %189 = vst [vmem:[#allocation2 + $0x28] sm:$0xff] %v168
    %190 = vst [vmem:[#allocation2 + $0x30] sm:$0xff] %v174
    %191 = vst [vmem:[#allocation2 + $0x38] sm:$0xff] %v180
    %192 = vst [vmem:[#allocation4] sm:$0xff] %v140
    %193 = vst [vmem:[#allocation4 + $0x8] sm:$0xff] %v146
    %194 = vst [vmem:[#allocation4 + $0x10] sm:$0xff] %v152
    %195 = vst [vmem:[#allocation4 + $0x18] sm:$0xff] %v158
    %196 = vst [vmem:[#allocation4 + $0x20] sm:$0xff] %v164
    %197 = vst [vmem:[#allocation4 + $0x28] sm:$0xff] %v170
    %198 = vst [vmem:[#allocation4 + $0x30] sm:$0xff] %v176
    %199 = vst [vmem:[#allocation4 + $0x38] sm:$0xff] %v182
    // Predicated region
    $region14: #{tpu_custom_call.1} parent=1 // pred_check
      _
    $region15: #{tpu_custom_call.1} parent=1 // pred_check_branch
      %201 = sbr.rel (0) target = $region17
    $region16: #{tpu_custom_call.1} parent=1 // pred_region
      %s203 = ssub.s32 1024, 1024
      %204 = vsyncadd [#allocation3], %s203
      %s205 = sshll.u32 [#allocation2], 4
      %s206 = int_to_ptr.vmem [resolvable:$true] %s205
      %211 = dma.vmem_to_hbm [thread:$0]  %s206, 1024, %s3, [#allocation3], 128, 128, 8
    $region17: #{tpu_custom_call.1} parent=1 // pred_fallthru
      _
    // Predicated region
    $region18: #{tpu_custom_call.1} parent=1 // pred_check
      _
    $region19: #{tpu_custom_call.1} parent=1 // pred_check_branch
      %213 = sbr.rel (0) target = $region21
    $region20: #{tpu_custom_call.1} parent=1 // pred_region
      %s215 = ssub.s32 1024, 1024
      %216 = vsyncadd [#allocation5], %s215
      %s217 = sshll.u32 [#allocation4], 4
      %s218 = int_to_ptr.vmem [resolvable:$true] %s217
      %223 = dma.vmem_to_hbm [thread:$0]  %s218, 1024, %s4, [#allocation5], 128, 128, 8
    $region21: #{tpu_custom_call.1} parent=1 // pred_fallthru
      _
    // Predicated region
    $region22: #{tpu_custom_call.1} parent=1 // pred_check
      _
    $region23: #{tpu_custom_call.1} parent=1 // pred_check_branch
      %225 = sbr.rel (0) target = $region25
    $region24: #{tpu_custom_call.1} parent=1 // pred_region
      %226 = dma.done [#allocation3], 1024
    $region25: #{tpu_custom_call.1} parent=1 // pred_fallthru
      _
    // Predicated region
    $region26: #{tpu_custom_call.1} parent=1 // pred_check
      _
    $region27: #{tpu_custom_call.1} parent=1 // pred_check_branch
      %228 = sbr.rel (0) target = $region29
    $region28: #{tpu_custom_call.1} parent=1 // pred_region
      %229 = dma.done [#allocation5], 1024
    $region29: #{tpu_custom_call.1} parent=1 // pred_fallthru
      _
    %230 = vsyncpa [#allocation3], 1
    %231 = vsyncpa [#allocation5], 1

</llo_original>
